<compile_context>
chip_gen: v7x
topology: tpu7x:2x2x1
jax: 0.10.0
libtpu: 0.0.40
codegen_flags: <defaults>
</compile_context>

<pallas_src>
import jax
import jax.numpy as jnp
from jax.experimental import pallas as pl
from jax.experimental.pallas import tpu as pltpu


def _ctg_kernel(x_ref, w_ref, a_ref, bbd_ref, o_ref, y_ref):
    # x_ref:   (NB, C_in, L)      current (t-block, batch-block) slab
    # w_ref:   (C_out, C_in)      1x1 conv weight
    # a_ref:   (L, L)             block-diagonal adjacency for this t-block
    # bbd_ref: (C_out, L) f32     bias folded through the graph contraction
    # o_ref:   (NB, C_out, L)
    # y_ref:   (NB*C_out, L)      VMEM scratch (compute dtype)
    nb, c_out, ell = o_ref.shape
    w = w_ref[...]
    # 1x1 conv == per-sample channel matmul on the MXU, f32 accumulation.
    # NB is small & static -> unrolled; results stacked into one scratch tile.
    for i in range(nb):
        y = jnp.dot(w, x_ref[i], preferred_element_type=jnp.float32)
        y_ref[i * c_out:(i + 1) * c_out, :] = y.astype(y_ref.dtype)
    # One stacked graph contraction for all NB samples and TB timesteps.
    out = jnp.dot(y_ref[...], a_ref[...], preferred_element_type=jnp.float32)
    out = out.reshape(nb, c_out, ell) + bbd_ref[...]
    o_ref[...] = out.astype(o_ref.dtype)


def _pick_blocking(T, V, max_lanes=256):
    """Return (TB, Tp, Vp): temporal block size and padded (T, V).

    Guarantees the merged lane block L = TB*Vp is either the full T*V extent
    (small inputs) or exactly 128 lanes (lane-dense, BlockSpec-legal), so the
    block-diagonal adjacency never exceeds a few hundred KiB of VMEM.
    """
    if T * V <= max_lanes:
        return T, T, V                       # single full-extent block, no padding
    if V <= 128:
        # Smallest divisor of 128 that is >= V (e.g. 25 -> 32, 18 -> 32).
        Vp = next(d for d in (1, 2, 4, 8, 16, 32, 64, 128) if d >= V)
        TB = 128 // Vp
    else:
        Vp = pl.cdiv(V, 128) * 128
        TB = 1
    Tp = pl.cdiv(T, TB) * TB                 # ragged last t-block -> zero pad
    return TB, Tp, Vp


def conv_temporal_graphical(x, A, weight, bias, *, compute_dtype=jnp.bfloat16,
                            max_lanes=256, batch_block=8):
    """x: (N, C_in, T, V), A: (T, V, V), weight: (C_out, C_in), bias: (C_out,).

    Returns (out, A) with out: (N, C_out, T, V), matching the PyTorch module.
    compute_dtype: MXU operand dtype (accumulation is always f32).  None -> x.dtype.
    """
    N, C_in, T, V = x.shape
    C_out = weight.shape[0]
    assert A.shape[0] == T, "adjacency leading dim (K) must equal T (module assert)"

    out_dtype = x.dtype
    if compute_dtype is None:
        compute_dtype = x.dtype

    TB, Tp, Vp = _pick_blocking(T, V, max_lanes)
    n_tb = Tp // TB
    L = TB * Vp

    # Zero-pad (T, V) only when required to make the lane block legal/dense.
    if (Tp, Vp) != (T, V):
        x = jnp.pad(x, ((0, 0), (0, 0), (0, Tp - T), (0, Vp - V)))
        A_p = jnp.pad(A, ((0, Tp - T), (0, Vp - V), (0, Vp - V)))
    else:
        A_p = A

    # Contiguous (T, V) -> one lane axis: metadata-only reshape (no HBM traffic
    # beyond the optional pad/cast above).
    x2 = x.reshape(N, C_in, Tp * Vp).astype(compute_dtype)

    # Block-diagonal packing of the TB adjacency matrices of each t-block:
    # A_bd[i, t*Vp+v, s*Vp+w] = delta(t, s) * A_p[i*TB+t, v, w].
    A_blocks = A_p.astype(compute_dtype).reshape(n_tb, TB, Vp, Vp)
    eye = jnp.eye(TB, dtype=compute_dtype)
    A_bd = jnp.einsum('ts,itvw->itvsw', eye, A_blocks).reshape(n_tb, L, L)

    # Bias folded through the graph contraction (kept in f32, added post-MXU):
    #   out += b[c] * sum_v A[t, v, w]
    col = A_p.astype(jnp.float32).sum(axis=1).reshape(n_tb, L)         # (n_tb, L)
    bias_bd = bias.astype(jnp.float32)[None, :, None] * col[:, None, :]  # (n_tb, C_out, L)

    w = weight.astype(compute_dtype)

    # Batch blocking: largest divisor of N <= batch_block (no batch padding).
    NB = max(d for d in range(1, min(batch_block, N) + 1) if N % d == 0)
    n_b = N // NB

    out2 = pl.pallas_call(
        _ctg_kernel,
        out_shape=jax.ShapeDtypeStruct((N, C_out, Tp * Vp), out_dtype),
        grid_spec=pltpu.PrefetchScalarGridSpec(
            num_scalar_prefetch=0,
            # t-block outermost, batch innermost: A_bd / W / bias_bd block
            # indices are constant along the inner axis -> DMA'd once per
            # t-block instead of once per grid step.
            grid=(n_tb, n_b),
            in_specs=[
                pl.BlockSpec((NB, C_in, L), lambda tb, nb: (nb, 0, tb)),
                pl.BlockSpec((C_out, C_in), lambda tb, nb: (0, 0)),
                pl.BlockSpec((None, L, L), lambda tb, nb: (tb, 0, 0)),
                pl.BlockSpec((None, C_out, L), lambda tb, nb: (tb, 0, 0)),
            ],
            out_specs=pl.BlockSpec((NB, C_out, L), lambda tb, nb: (nb, 0, tb)),
            scratch_shapes=[pltpu.VMEM((NB * C_out, L), compute_dtype)],
        ),
        compiler_params=pltpu.CompilerParams(
            dimension_semantics=("parallel", "parallel")),
    )(x2, w, A_bd, bias_bd)

    out = out2.reshape(N, C_out, Tp, Vp)
    if (Tp, Vp) != (T, V):
        out = out[:, :, :T, :V]
    return out, A


if __name__ == "__main__":
    # Small shapes consistent with the module: N batch, C_in channels, T frames,
    # V graph nodes; A.shape[0] (== kernel_size) must equal T per the einsum.
    N, C_in, C_out, T, V = 2, 4, 8, 8, 16

    key = jax.random.PRNGKey(0)
    kx, ka, kw, kb = jax.random.split(key, 4)
    x = jax.random.normal(kx, (N, C_in, T, V), dtype=jnp.float32)
    A = jax.random.normal(ka, (T, V, V), dtype=jnp.float32)
    # Deterministic synthetic Conv2d(C_in, C_out, kernel=(1,1)) parameters.
    weight = jax.random.normal(kw, (C_out, C_in), dtype=jnp.float32) * 0.1
    bias = jax.random.normal(kb, (C_out,), dtype=jnp.float32) * 0.1

    # Pure-JAX reference (same math as the PyTorch forward).
    y_ref = jnp.einsum('oc,nctv->notv', weight, x) + bias[None, :, None, None]
    ref = jnp.einsum('nctv,tvw->nctw', y_ref, A)

    # Exact-precision path (f32 MXU operands): tight tolerance.
    out_f32, A_out = conv_temporal_graphical(x, A, weight, bias,
                                             compute_dtype=jnp.float32)
    jax.block_until_ready(out_f32)
    assert out_f32.shape == (N, C_out, T, V)
    assert jnp.allclose(out_f32, ref, atol=1e-4, rtol=1e-4), "f32 mismatch vs reference"
    assert A_out.shape == A.shape

    # Default fast path (bf16 operands, f32 accumulation): loose tolerance.
    out_bf16, _ = conv_temporal_graphical(x, A, weight, bias)
    jax.block_until_ready(out_bf16)
    assert jnp.allclose(out_bf16, ref, atol=5e-2, rtol=5e-2), "bf16 mismatch vs reference"

    print("KERNEL_OK")
</pallas_src>

<mosaic_0001>
module attributes {stable_mosaic.version = 11 : i64} {
  func.func @_ctg_kernel(%arg0: i32, %arg1: i32, %arg2: memref<2x4x128xf32, #tpu.memory_space<vmem>>, %arg3: memref<8x4xf32, #tpu.memory_space<vmem>>, %arg4: memref<1x128x128xf32, #tpu.memory_space<vmem>>, %arg5: memref<1x8x128xf32, #tpu.memory_space<vmem>>, %arg6: memref<2x8x128xf32, #tpu.memory_space<vmem>>, %arg7: memref<16x128xf32, #tpu.memory_space<vmem>>) attributes {dimension_semantics = [#tpu.dimension_semantics<parallel>, #tpu.dimension_semantics<parallel>], iteration_bounds = array<i64: 1, 1>, scalar_prefetch = 0 : i64, scratch_operands = 1 : i64, tpu.core_type = #tpu.core_type<tc>, window_params = [{transform_indices = @transform_0, window_bounds = array<i64: 2, 4, 128>}, {pipeline_mode = #tpu.pipeline_mode<synchronous>, transform_indices = @transform_1, window_bounds = array<i64: 8, 4>}, {transform_indices = @transform_2, window_bounds = array<i64: 1, 128, 128>}, {transform_indices = @transform_3, window_bounds = array<i64: 1, 8, 128>}, {transform_indices = @transform_4, window_bounds = array<i64: 2, 8, 128>}]} {
    %c0 = arith.constant 0 : index
    %c0_0 = arith.constant 0 : index
    %0 = vector.load %arg3[%c0, %c0_0] : memref<8x4xf32, #tpu.memory_space<vmem>>, vector<8x4xf32>
    %c0_1 = arith.constant 0 : index
    %c0_2 = arith.constant 0 : index
    %c0_3 = arith.constant 0 : index
    %1 = vector.load %arg2[%c0_1, %c0_2, %c0_3] : memref<2x4x128xf32, #tpu.memory_space<vmem>>, vector<1x4x128xf32>
    %2 = vector.shape_cast %1 : vector<1x4x128xf32> to vector<4x128xf32>
    %cst = arith.constant dense<0.000000e+00> : vector<8x128xf32>
    %3 = tpu.matmul %0, %2, %cst {dimension_numbers = #tpu.dot_dimension_numbers<[1], [0], [0], [1], [0, 0, 1, 1], [], []>} : vector<8x4xf32>, vector<4x128xf32>, vector<8x128xf32> -> vector<8x128xf32>
    %c0_4 = arith.constant 0 : index
    %c0_5 = arith.constant 0 : index
    %4 = vector.load %arg7[%c0_4, %c0_5] : memref<16x128xf32, #tpu.memory_space<vmem>>, vector<8x128xf32>
    tpu.vector_store %arg7[%c0_4, %c0_5], %3 {strides = array<i32>} : memref<16x128xf32, #tpu.memory_space<vmem>>, vector<8x128xf32>,
    %c1 = arith.constant 1 : index
    %c0_6 = arith.constant 0 : index
    %c0_7 = arith.constant 0 : index
    %5 = vector.load %arg2[%c1, %c0_6, %c0_7] : memref<2x4x128xf32, #tpu.memory_space<vmem>>, vector<1x4x128xf32>
    %6 = vector.shape_cast %5 : vector<1x4x128xf32> to vector<4x128xf32>
    %cst_8 = arith.constant dense<0.000000e+00> : vector<8x128xf32>
    %7 = tpu.matmul %0, %6, %cst_8 {dimension_numbers = #tpu.dot_dimension_numbers<[1], [0], [0], [1], [0, 0, 1, 1], [], []>} : vector<8x4xf32>, vector<4x128xf32>, vector<8x128xf32> -> vector<8x128xf32>
    %c8 = arith.constant 8 : index
    %c0_9 = arith.constant 0 : index
    %8 = vector.load %arg7[%c8, %c0_9] : memref<16x128xf32, #tpu.memory_space<vmem>>, vector<8x128xf32>
    tpu.vector_store %arg7[%c8, %c0_9], %7 {strides = array<i32>} : memref<16x128xf32, #tpu.memory_space<vmem>>, vector<8x128xf32>,
    %c0_10 = arith.constant 0 : index
    %c0_11 = arith.constant 0 : index
    %9 = vector.load %arg7[%c0_10, %c0_11] : memref<16x128xf32, #tpu.memory_space<vmem>>, vector<16x128xf32>
    %c0_12 = arith.constant 0 : index
    %c0_13 = arith.constant 0 : index
    %c0_14 = arith.constant 0 : index
    %10 = vector.load %arg4[%c0_12, %c0_13, %c0_14] : memref<1x128x128xf32, #tpu.memory_space<vmem>>, vector<1x128x128xf32>
    %11 = vector.shape_cast %10 : vector<1x128x128xf32> to vector<128x128xf32>
    %cst_15 = arith.constant dense<0.000000e+00> : vector<16x128xf32>
    %12 = tpu.matmul %9, %11, %cst_15 {dimension_numbers = #tpu.dot_dimension_numbers<[1], [0], [0], [1], [0, 0, 1, 1], [], []>} : vector<16x128xf32>, vector<128x128xf32>, vector<16x128xf32> -> vector<16x128xf32>
    %13 = vector.shape_cast %12 : vector<16x128xf32> to vector<2x8x128xf32>
    %c0_16 = arith.constant 0 : index
    %c0_17 = arith.constant 0 : index
    %c0_18 = arith.constant 0 : index
    %14 = vector.load %arg5[%c0_16, %c0_17, %c0_18] : memref<1x8x128xf32, #tpu.memory_space<vmem>>, vector<1x8x128xf32>
    %15 = vector.shape_cast %14 : vector<1x8x128xf32> to vector<8x128xf32>
    %16 = vector.shape_cast %15 : vector<8x128xf32> to vector<1x8x128xf32>
    %17 = vector.broadcast %16 : vector<1x8x128xf32> to vector<2x8x128xf32>
    %18 = arith.addf %13, %17 : vector<2x8x128xf32>
    %c0_19 = arith.constant 0 : index
    %c0_20 = arith.constant 0 : index
    %c0_21 = arith.constant 0 : index
    %19 = vector.load %arg6[%c0_19, %c0_20, %c0_21] : memref<2x8x128xf32, #tpu.memory_space<vmem>>, vector<2x8x128xf32>
    tpu.vector_store %arg6[%c0_19, %c0_20, %c0_21], %18 {strides = array<i32>} : memref<2x8x128xf32, #tpu.memory_space<vmem>>, vector<2x8x128xf32>,
    return
  }
  func.func @transform_0(%arg0: i32, %arg1: i32) -> (i32, i32, i32) {
    %c0_i32 = arith.constant 0 : i32
    %c0_i32_0 = arith.constant 0 : i32
    return %arg1, %c0_i32, %arg0 : i32, i32, i32
  }
  func.func @transform_1(%arg0: i32, %arg1: i32) -> (i32, i32) {
    %c0_i32 = arith.constant 0 : i32
    %c0_i32_0 = arith.constant 0 : i32
    %c0_i32_1 = arith.constant 0 : i32
    return %c0_i32, %c0_i32_0 : i32, i32
  }
  func.func @transform_2(%arg0: i32, %arg1: i32) -> (i32, i32, i32) {
    %c0_i32 = arith.constant 0 : i32
    %c0_i32_0 = arith.constant 0 : i32
    %c0_i32_1 = arith.constant 0 : i32
    return %arg0, %c0_i32, %c0_i32_0 : i32, i32, i32
  }
  func.func @transform_3(%arg0: i32, %arg1: i32) -> (i32, i32, i32) {
    %c0_i32 = arith.constant 0 : i32
    %c0_i32_0 = arith.constant 0 : i32
    %c0_i32_1 = arith.constant 0 : i32
    return %arg0, %c0_i32, %c0_i32_0 : i32, i32, i32
  }
  func.func @transform_4(%arg0: i32, %arg1: i32) -> (i32, i32, i32) {
    %c0_i32 = arith.constant 0 : i32
    %c0_i32_0 = arith.constant 0 : i32
    return %arg1, %c0_i32, %arg0 : i32, i32, i32
  }
}

</mosaic_0001>

<llo_original>
// kernel: tpu_custom_call.1
$region0: #{tpu_custom_call.1}
  #allocation0 [shape = 'u32[]', space=smem, size = 0x4, offset = 0x4, fixed_abs, tag = 'smem constant byte address 0x4 - core index']
  #allocation1 [shape = 'u32[144,128]{1,0:T(1,128)}', space=vmem, size = 0x12000, scoped, tag = 'internal scratch']
  #allocation2 [shape = 'f32[16,128]{1,0:T(8,128)}', space=vmem, size = 0x2000, scoped, tag = 'scratch operand']
  %s0 = inlined_call_operand.vmem [shape: f32[2,4,128], index: 0, kind: input, shape index: {}]
  %s1 = inlined_call_operand.vmem [shape: f32[8,4], index: 1, kind: input, shape index: {}]
  %s2 = inlined_call_operand.hbm [shape: f32[1,128,128], index: 2, kind: input, shape index: {}]
  %s3 = inlined_call_operand.vmem [shape: f32[1,8,128], index: 3, kind: input, shape index: {}]
  %s4 = inlined_call_operand.hbm [shape: f32[2,8,128], index: 4, kind: output, shape index: {}]
  %s5 = sld [smem:[#allocation0]]
  $region30: #{tpu_custom_call.1} parent=0
    _
  %s7 = ssub.s32 1, %s5
  %s8 = scalar_select 0, %s7, %s5
  $region1: #{tpu_custom_call.1} parent=0
    #allocation3 [shape = 'u8[65536]{0}', space=vmem, size = 0x10000, scoped, tag = 'input window, operand 2, single buffered']
    #allocation4 [shape = 's32[1]{0}', space=sflag, size = 0x4, scoped, tag = 'scoped memory for tpu_custom_call.1']
    #allocation5 [shape = 's32[1]{0}', space=sflag, size = 0x4, scoped, tag = 'scoped memory for tpu_custom_call.1']
    #allocation6 [shape = 'u8[8192]{0}', space=vmem, size = 0x2000, scoped, tag = 'output window, operand 0, single buffered']
    %9 = vsyncpa [#allocation4], 0
    %10 = vsyncpa [#allocation5], 0
    // Predicated region
    $region2: #{tpu_custom_call.1} parent=1 // pred_check
      _
    $region3: #{tpu_custom_call.1} parent=1 // pred_check_branch
      %12 = sbr.rel (0) target = $region5
    $region4: #{tpu_custom_call.1} parent=1 // pred_region
      _
    $region5: #{tpu_custom_call.1} parent=1 // pred_fallthru
      _
    // Predicated region
    $region6: #{tpu_custom_call.1} parent=1 // pred_check
      _
    $region7: #{tpu_custom_call.1} parent=1 // pred_check_branch
      %14 = sbr.rel (0) target = $region9
    $region8: #{tpu_custom_call.1} parent=1 // pred_region
      _
    $region9: #{tpu_custom_call.1} parent=1 // pred_fallthru
      _
    // Predicated region
    $region10: #{tpu_custom_call.1} parent=1 // pred_check
      _
    $region11: #{tpu_custom_call.1} parent=1 // pred_check_branch
      %16 = sbr.rel (0) target = $region13
    $region12: #{tpu_custom_call.1} parent=1 // pred_region
      %s18 = ssub.s32 2048, 2048
      %19 = vsyncadd [#allocation4], %s18
      %s20 = sshll.u32 [#allocation3], 4
      %s21 = int_to_ptr.vmem [resolvable:$true] %s20
      %26 = dma.hbm_to_vmem [thread:$0]  %s2, 2048, %s21, [#allocation4], 128, 128, 8
    $region13: #{tpu_custom_call.1} parent=1 // pred_fallthru
      _
    // Predicated region
    $region14: #{tpu_custom_call.1} parent=1 // pred_check
      _
    $region15: #{tpu_custom_call.1} parent=1 // pred_check_branch
      %28 = sbr.rel (0) target = $region17
    $region16: #{tpu_custom_call.1} parent=1 // pred_region
      _
    $region17: #{tpu_custom_call.1} parent=1 // pred_fallthru
      _
    // Predicated region
    $region18: #{tpu_custom_call.1} parent=1 // pred_check
      _
    $region19: #{tpu_custom_call.1} parent=1 // pred_check_branch
      %30 = sbr.rel (0) target = $region21
    $region20: #{tpu_custom_call.1} parent=1 // pred_region
      %31 = dma.done [#allocation4], 2048
    $region21: #{tpu_custom_call.1} parent=1 // pred_fallthru
      _
    %v32 = vld [vmem:[%s1] sm:$0xff]
    %v33 = vld [vmem:[%s0] sm:$0xf]
    %vm34 = vcmask 31744
    %v36 = vsel %vm34, %v32, 0
    %vm38 = vcmask 1043456
    %v40 = vsel %vm38, %v33, 0
    %42 = vmatprep.subr.mxu0 0.0
    %43 = vmatpush1.msra.mxu0 %v40
    %44 = vmatprep.subr.mxu0 0.0
    %45 = vmatpush1.msra.mxu0 0.0
    %46 = vmatprep.subr.mxu0 0.0
    %47 = vmatpush1.msra.mxu0 0.0
    %48 = vmatprep.subr.mxu0 0.0
    %49 = vmatpush1.msra.mxu0 0.0
    %50 = vmatprep.subr.mxu0 0.0
    %51 = vmatpush1.msra.mxu0 0.0
    %52 = vmatprep.subr.mxu0 0.0
    %53 = vmatpush1.msra.mxu0 0.0
    %54 = vmatprep.subr.mxu0 0.0
    %55 = vmatpush1.msra.mxu0 0.0
    %56 = vmatprep.subr.mxu0 0.0
    %57 = vmatpush1.msra.mxu0 0.0
    %58 = vmatprep.subr.mxu0 0.0
    %59 = vmatpush1.msra.mxu0 0.0
    %60 = vmatprep.subr.mxu0 0.0
    %61 = vmatpush1.msra.mxu0 0.0
    %62 = vmatprep.subr.mxu0 0.0
    %63 = vmatpush1.msra.mxu0 0.0
    %64 = vmatprep.subr.mxu0 0.0
    %65 = vmatpush1.msra.mxu0 0.0
    %66 = vmatprep.subr.mxu0 0.0
    %67 = vmatpush1.msra.mxu0 0.0
    %68 = vmatprep.subr.mxu0 0.0
    %69 = vmatpush1.msra.mxu0 0.0
    %70 = vmatprep.subr.mxu0 0.0
    %71 = vmatpush1.msra.mxu0 0.0
    %72 = vmatprep.subr.mxu0 0.0
    %73 = vmatpush1.msra.mxu0 0.0
    %74 = vmatprep.subr.mxu0 0.0
    %75 = vmatpush1.msra.mxu0 0.0
    %76 = vmatprep.subr.mxu0 0.0
    %77 = vmatpush1.msra.mxu0 0.0
    %78 = vmatprep.subr.mxu0 0.0
    %79 = vmatpush1.msra.mxu0 0.0
    %80 = vmatprep.subr.mxu0 0.0
    %81 = vmatpush1.msra.mxu0 0.0
    %82 = vmatprep.subr.mxu0 0.0
    %83 = vmatpush1.msra.mxu0 0.0
    %84 = vmatprep.subr.mxu0 0.0
    %85 = vmatpush1.msra.mxu0 0.0
    %86 = vmatprep.subr.mxu0 0.0
    %87 = vmatpush1.msra.mxu0 0.0
    %88 = vmatprep.subr.mxu0 0.0
    %89 = vmatpush1.msra.mxu0 0.0
    %90 = vmatprep.subr.mxu0 0.0
    %91 = vmatpush1.msra.mxu0 0.0
    %92 = vmatprep.subr.mxu0 0.0
    %93 = vmatpush1.msra.mxu0 0.0
    %94 = vmatprep.subr.mxu0 0.0
    %95 = vmatpush1.msra.mxu0 0.0
    %96 = vmatprep.subr.mxu0 0.0
    %97 = vmatpush1.msra.mxu0 0.0
    %98 = vmatprep.subr.mxu0 0.0
    %99 = vmatpush1.msra.mxu0 0.0
    %100 = vmatprep.subr.mxu0 0.0
    %101 = vmatpush1.msra.mxu0 0.0
    %102 = vmatprep.subr.mxu0 0.0
    %103 = vmatpush1.msra.mxu0 0.0
    %104 = vmatprep.subr.mxu0 0.0
    %105 = vmatpush1.msra.mxu0 0.0
    %106 = vmatprep.mubr.f32.mxu0 0.0
    %107 = vmatmul.mubr.f32.gmra.mrb[0].mxu0 %v36
    %v108 = vpop.f32.mrb[0].mxu0
    %v109 = vadd.f32 0.0, %v108
    %v110 = vpop.f32.mrb[0].mxu0
    %111 = vdwg.mxu0
    %112 = vst [vmem:[#allocation2] sm:$0xff] %v109
    %s113 = scalar_lea.vmem %s0, 4
    %v114 = vld [vmem:[%s113] sm:$0xf]
    %v116 = vsel %vm38, %v114, 0
    %118 = vmatprep.subr.mxu0 0.0
    %119 = vmatpush1.msra.mxu0 %v116
    %120 = vmatprep.subr.mxu0 0.0
    %121 = vmatpush1.msra.mxu0 0.0
    %122 = vmatprep.subr.mxu0 0.0
    %123 = vmatpush1.msra.mxu0 0.0
    %124 = vmatprep.subr.mxu0 0.0
    %125 = vmatpush1.msra.mxu0 0.0
    %126 = vmatprep.subr.mxu0 0.0
    %127 = vmatpush1.msra.mxu0 0.0
    %128 = vmatprep.subr.mxu0 0.0
    %129 = vmatpush1.msra.mxu0 0.0
    %130 = vmatprep.subr.mxu0 0.0
    %131 = vmatpush1.msra.mxu0 0.0
    %132 = vmatprep.subr.mxu0 0.0
    %133 = vmatpush1.msra.mxu0 0.0
    %134 = vmatprep.subr.mxu0 0.0
    %135 = vmatpush1.msra.mxu0 0.0
    %136 = vmatprep.subr.mxu0 0.0
    %137 = vmatpush1.msra.mxu0 0.0
    %138 = vmatprep.subr.mxu0 0.0
    %139 = vmatpush1.msra.mxu0 0.0
    %140 = vmatprep.subr.mxu0 0.0
    %141 = vmatpush1.msra.mxu0 0.0
    %142 = vmatprep.subr.mxu0 0.0
    %143 = vmatpush1.msra.mxu0 0.0
    %144 = vmatprep.subr.mxu0 0.0
    %145 = vmatpush1.msra.mxu0 0.0
    %146 = vmatprep.subr.mxu0 0.0
    %147 = vmatpush1.msra.mxu0 0.0
    %148 = vmatprep.subr.mxu0 0.0
    %149 = vmatpush1.msra.mxu0 0.0
    %150 = vmatprep.subr.mxu0 0.0
    %151 = vmatpush1.msra.mxu0 0.0
    %152 = vmatprep.subr.mxu0 0.0
    %153 = vmatpush1.msra.mxu0 0.0
    %154 = vmatprep.subr.mxu0 0.0
    %155 = vmatpush1.msra.mxu0 0.0
    %156 = vmatprep.subr.mxu0 0.0
    %157 = vmatpush1.msra.mxu0 0.0
    %158 = vmatprep.subr.mxu0 0.0
    %159 = vmatpush1.msra.mxu0 0.0
    %160 = vmatprep.subr.mxu0 0.0
    %161 = vmatpush1.msra.mxu0 0.0
    %162 = vmatprep.subr.mxu0 0.0
    %163 = vmatpush1.msra.mxu0 0.0
    %164 = vmatprep.subr.mxu0 0.0
    %165 = vmatpush1.msra.mxu0 0.0
    %166 = vmatprep.subr.mxu0 0.0
    %167 = vmatpush1.msra.mxu0 0.0
    %168 = vmatprep.subr.mxu0 0.0
    %169 = vmatpush1.msra.mxu0 0.0
    %170 = vmatprep.subr.mxu0 0.0
    %171 = vmatpush1.msra.mxu0 0.0
    %172 = vmatprep.subr.mxu0 0.0
    %173 = vmatpush1.msra.mxu0 0.0
    %174 = vmatprep.subr.mxu0 0.0
    %175 = vmatpush1.msra.mxu0 0.0
    %176 = vmatprep.subr.mxu0 0.0
    %177 = vmatpush1.msra.mxu0 0.0
    %178 = vmatprep.subr.mxu0 0.0
    %179 = vmatpush1.msra.mxu0 0.0
    %180 = vmatprep.subr.mxu0 0.0
    %181 = vmatpush1.msra.mxu0 0.0
    %182 = vmatprep.mubr.f32.mxu0 0.0
    %183 = vmatmul.mubr.f32.gmra.mrb[0].mxu0 %v36
    %v184 = vpop.f32.mrb[0].mxu0
    %v185 = vadd.f32 0.0, %v184
    %v186 = vpop.f32.mrb[0].mxu0
    %187 = vdwg.mxu0
    %188 = vst [vmem:[#allocation2 + $0x8] sm:$0xff] %v185
    %v189 = vld [vmem:[#allocation2] sm:$0xff]
    %v190 = vld [vmem:[#allocation2 + $0x8] sm:$0xff]
    %v191 = vld [vmem:[#allocation3] sm:$0xff]
    %v192 = vld [vmem:[#allocation3 + $0x8] sm:$0xff]
    %v193 = vld [vmem:[#allocation3 + $0x10] sm:$0xff]
    %v194 = vld [vmem:[#allocation3 + $0x18] sm:$0xff]
    %v195 = vld [vmem:[#allocation3 + $0x20] sm:$0xff]
    %v196 = vld [vmem:[#allocation3 + $0x28] sm:$0xff]
    %v197 = vld [vmem:[#allocation3 + $0x30] sm:$0xff]
    %v198 = vld [vmem:[#allocation3 + $0x38] sm:$0xff]
    %v199 = vld [vmem:[#allocation3 + $0x40] sm:$0xff]
    %v200 = vld [vmem:[#allocation3 + $0x48] sm:$0xff]
    %v201 = vld [vmem:[#allocation3 + $0x50] sm:$0xff]
    %v202 = vld [vmem:[#allocation3 + $0x58] sm:$0xff]
    %v203 = vld [vmem:[#allocation3 + $0x60] sm:$0xff]
    %v204 = vld [vmem:[#allocation3 + $0x68] sm:$0xff]
    %v205 = vld [vmem:[#allocation3 + $0x70] sm:$0xff]
    %v206 = vld [vmem:[#allocation3 + $0x78] sm:$0xff]
    %207 = vmatprep.subr.mxu0 0.0
    %208 = vmatpush1.msra.mxu0 %v191
    %209 = vmatprep.subr.mxu0 0.0
    %210 = vmatpush1.msra.mxu0 %v192
    %211 = vmatprep.subr.mxu0 0.0
    %212 = vmatpush1.msra.mxu0 %v193
    %213 = vmatprep.subr.mxu0 0.0
    %214 = vmatpush1.msra.mxu0 %v194
    %215 = vmatprep.subr.mxu0 0.0
    %216 = vmatpush1.msra.mxu0 %v195
    %217 = vmatprep.subr.mxu0 0.0
    %218 = vmatpush1.msra.mxu0 %v196
    %219 = vmatprep.subr.mxu0 0.0
    %220 = vmatpush1.msra.mxu0 %v197
    %221 = vmatprep.subr.mxu0 0.0
    %222 = vmatpush1.msra.mxu0 %v198
    %223 = vmatprep.subr.mxu0 0.0
    %224 = vmatpush1.msra.mxu0 %v199
    %225 = vmatprep.subr.mxu0 0.0
    %226 = vmatpush1.msra.mxu0 %v200
    %227 = vmatprep.subr.mxu0 0.0
    %228 = vmatpush1.msra.mxu0 %v201
    %229 = vmatprep.subr.mxu0 0.0
    %230 = vmatpush1.msra.mxu0 %v202
    %231 = vmatprep.subr.mxu0 0.0
    %232 = vmatpush1.msra.mxu0 %v203
    %233 = vmatprep.subr.mxu0 0.0
    %234 = vmatpush1.msra.mxu0 %v204
    %235 = vmatprep.subr.mxu0 0.0
    %236 = vmatpush1.msra.mxu0 %v205
    %237 = vmatprep.subr.mxu0 0.0
    %238 = vmatpush1.msra.mxu0 %v206
    %239 = vmatprep.subr.mxu0 0.0
    %240 = vmatpush1.msra.mxu0 0.0
    %241 = vmatprep.subr.mxu0 0.0
    %242 = vmatpush1.msra.mxu0 0.0
    %243 = vmatprep.subr.mxu0 0.0
    %244 = vmatpush1.msra.mxu0 0.0
    %245 = vmatprep.subr.mxu0 0.0
    %246 = vmatpush1.msra.mxu0 0.0
    %247 = vmatprep.subr.mxu0 0.0
    %248 = vmatpush1.msra.mxu0 0.0
    %249 = vmatprep.subr.mxu0 0.0
    %250 = vmatpush1.msra.mxu0 0.0
    %251 = vmatprep.subr.mxu0 0.0
    %252 = vmatpush1.msra.mxu0 0.0
    %253 = vmatprep.subr.mxu0 0.0
    %254 = vmatpush1.msra.mxu0 0.0
    %255 = vmatprep.subr.mxu0 0.0
    %256 = vmatpush1.msra.mxu0 0.0
    %257 = vmatprep.subr.mxu0 0.0
    %258 = vmatpush1.msra.mxu0 0.0
    %259 = vmatprep.subr.mxu0 0.0
    %260 = vmatpush1.msra.mxu0 0.0
    %261 = vmatprep.subr.mxu0 0.0
    %262 = vmatpush1.msra.mxu0 0.0
    %263 = vmatprep.subr.mxu0 0.0
    %264 = vmatpush1.msra.mxu0 0.0
    %265 = vmatprep.subr.mxu0 0.0
    %266 = vmatpush1.msra.mxu0 0.0
    %267 = vmatprep.subr.mxu0 0.0
    %268 = vmatpush1.msra.mxu0 0.0
    %269 = vmatprep.subr.mxu0 0.0
    %270 = vmatpush1.msra.mxu0 0.0
    %271 = vmatprep.mubr.f32.mxu0 0.0
    %272 = vmatmul.mubr.f32.gmra.mrb[0].mxu0 %v189
    %v273 = vpop.f32.mrb[0].mxu0
    %v274 = vadd.f32 0.0, %v273
    %v275 = vpop.f32.mrb[0].mxu0
    %276 = vmatprep.mubr.f32.mxu0 0.0
    %277 = vmatmul.mubr.f32.gmra.mrb[0].mxu0 %v190
    %v278 = vpop.f32.mrb[0].mxu0
    %v279 = vadd.f32 0.0, %v278
    %v280 = vpop.f32.mrb[0].mxu0
    %281 = vdwg.mxu0
    %v282 = vld [vmem:[%s3] sm:$0xff]
    %v283 = vadd.f32 %v274, %v282
    %v284 = vadd.f32 %v279, %v282
    %285 = vst [vmem:[#allocation6] sm:$0xff] %v283
    %286 = vst [vmem:[#allocation6 + $0x8] sm:$0xff] %v284
    // Predicated region
    $region22: #{tpu_custom_call.1} parent=1 // pred_check
      _
    $region23: #{tpu_custom_call.1} parent=1 // pred_check_branch
      %288 = sbr.rel (0) target = $region25
    $region24: #{tpu_custom_call.1} parent=1 // pred_region
      %s290 = ssub.s32 256, 256
      %291 = vsyncadd [#allocation5], %s290
      %s292 = sshll.u32 [#allocation6], 4
      %s293 = int_to_ptr.vmem [resolvable:$true] %s292
      %298 = dma.vmem_to_hbm [thread:$0]  %s293, 256, %s4, [#allocation5], 128, 128, 8
    $region25: #{tpu_custom_call.1} parent=1 // pred_fallthru
      _
    // Predicated region
    $region26: #{tpu_custom_call.1} parent=1 // pred_check
      _
    $region27: #{tpu_custom_call.1} parent=1 // pred_check_branch
      %300 = sbr.rel (0) target = $region29
    $region28: #{tpu_custom_call.1} parent=1 // pred_region
      %301 = dma.done [#allocation5], 256
    $region29: #{tpu_custom_call.1} parent=1 // pred_fallthru
      _
    %302 = vsyncpa [#allocation4], 1
    %303 = vsyncpa [#allocation5], 1

</llo_original>
